<compile_context>
chip_gen: v5e
topology: v5e:2x2
jax: 0.10.0
libtpu: 0.0.40
codegen_flags: <defaults>
</compile_context>

<pallas_src>
import jax
import jax.numpy as jnp
import numpy as np
from jax import lax
from jax.experimental import pallas as pl
from jax.experimental.pallas import tpu as pltpu

LANE = 128


def _round_up(x, m):
    return (x + m - 1) // m * m


def conv_block_forward(x_nchw, w_oihw, bias, gamma, beta, eps=1e-5):
    """Matches PyTorch conv_block.forward in train mode:
       Conv2d(k=3,s=1,p=1,bias=True) -> BatchNorm2d with batch stats (biased var) -> ReLU.
       The conv bias is mathematically a no-op under train-mode BN (it shifts y and the batch
       mean identically), so the kernel does not use it."""
    del bias  # cancels exactly inside train-mode BatchNorm
    N, Cin, H, W = x_nchw.shape
    Cout, _, KH, KW = w_oihw.shape
    pad = 1
    HW = H * W
    Kdim = KH * KW * Cin
    Cpad = _round_up(Cout, LANE)

    # ---- layout glue (plain JAX): NCHW -> per-image (Kdim, HW) im2col, channels on sublanes ----
    x_p = jnp.pad(x_nchw, ((0, 0), (0, 0), (pad, pad), (pad, pad)))
    taps = [x_p[:, :, kh:kh + H, kw:kw + W] for kh in range(KH) for kw in range(KW)]
    patch = jnp.stack(taps, axis=1).reshape(N, Kdim, HW).astype(jnp.bfloat16)   # (N, 9*Cin, H*W)

    # weight order must match tap order (kh, kw, cin): (Cout,Cin,KH,KW) -> (Cpad, Kdim)
    w = jnp.transpose(w_oihw, (0, 2, 3, 1)).reshape(Cout, Kdim)
    w = jnp.pad(w, ((0, Cpad - Cout), (0, 0))).astype(jnp.bfloat16)
    g2 = jnp.pad(gamma.reshape(Cout, 1), ((0, Cpad - Cout), (0, 0)))
    bt2 = jnp.pad(beta.reshape(Cout, 1), ((0, Cpad - Cout), (0, 0)))

    inv_count = 1.0 / float(N * HW)
    last = N - 1

    def kernel(patch_ref, w_ref, gamma_ref, beta_ref, out_ref,
               y_sc, sum_sc, sq_sc, scale_sc, shift_sc):
        p = pl.program_id(0)          # pass: 0 = conv + stats, 1 = BN fold + apply + ReLU
        n = pl.program_id(1)          # batch element

        # ---- pass 0: bf16 MXU conv, keep y resident in VMEM (bf16), accumulate f32 stats ------
        @pl.when(p == 0)
        def _():
            @pl.when(n == 0)
            def _():
                sum_sc[...] = jnp.zeros_like(sum_sc)
                sq_sc[...] = jnp.zeros_like(sq_sc)
            y = jnp.dot(w_ref[...], patch_ref[...],
                        preferred_element_type=jnp.float32)            # (Cpad, HW), f32 acc
            y_sc[n] = y.astype(y_sc.dtype)
            sum_sc[...] += jnp.sum(y, axis=1, keepdims=True)
            sq_sc[...] += jnp.sum(y * y, axis=1, keepdims=True)

        # ---- pass 1: fold BN once (n==0), then scale+shift+ReLU, lane-dense unpadded store ----
        @pl.when(p == 1)
        def _():
            @pl.when(n == 0)
            def _():
                mean = sum_sc[...] * inv_count
                var = jnp.maximum(sq_sc[...] * inv_count - mean * mean, 0.0)
                scale = gamma_ref[...] * lax.rsqrt(var + eps)
                scale_sc[...] = scale
                shift_sc[...] = beta_ref[...] - mean * scale
            y = y_sc[n].astype(jnp.float32)                             # (Cpad, HW)
            z = jnp.maximum(y * scale_sc[...] + shift_sc[...], 0.0)
            out_ref[...] = z[:Cout, :].astype(out_ref.dtype)            # only real channels -> HBM

    def patch_map(p, n):
        # only pass 0 advances through the batch -> exactly N patch DMAs over the whole grid
        return (jnp.where(p == 0, n, last), 0, 0)

    def out_map(p, n):
        # constant (block 0) during pass 0, advances only in pass 1 -> exactly N writebacks
        return (n * p, 0, 0)

    # explicit VMEM budget: resident y + double-buffered patch/out blocks + weights + headroom
    vmem_need = (N * Cpad * HW * 2                        # y_sc (bf16)
                 + 2 * _round_up(Kdim, 16) * HW * 2       # patch block, double buffered
                 + 2 * Cout * HW * 4                      # out block, double buffered
                 + 2 * Cpad * _round_up(Kdim, LANE) * 2   # weight (lane padded), double buffered
                 + 8 * Cpad * LANE * 4)                   # per-channel operands / scratches
    vmem_limit = int(min(max(2 * vmem_need, 32 * 2**20), 64 * 2**20))

    y_out = pl.pallas_call(
        kernel,
        out_shape=jax.ShapeDtypeStruct((N, Cout, HW), jnp.float32),
        grid_spec=pltpu.PrefetchScalarGridSpec(
            num_scalar_prefetch=0,
            grid=(2, N),
            in_specs=[
                pl.BlockSpec((None, Kdim, HW), patch_map),
                pl.BlockSpec((Cpad, Kdim), lambda p, n: (0, 0)),
                pl.BlockSpec((Cpad, 1), lambda p, n: (0, 0)),
                pl.BlockSpec((Cpad, 1), lambda p, n: (0, 0)),
            ],
            out_specs=pl.BlockSpec((None, Cout, HW), out_map),
            scratch_shapes=[
                pltpu.VMEM((N, Cpad, HW), jnp.bfloat16),   # conv output, whole batch, no HBM trip
                pltpu.VMEM((Cpad, 1), jnp.float32),        # per-channel sum
                pltpu.VMEM((Cpad, 1), jnp.float32),        # per-channel sum of squares
                pltpu.VMEM((Cpad, 1), jnp.float32),        # folded BN scale
                pltpu.VMEM((Cpad, 1), jnp.float32),        # folded BN shift
            ],
        ),
        compiler_params=pltpu.CompilerParams(
            # stats + resident y scratch carry across both grid axes -> sequential execution.
            dimension_semantics=("arbitrary", "arbitrary"),
            vmem_limit_bytes=vmem_limit),
    )(patch, w, g2, bt2)

    return y_out.reshape(N, Cout, H, W)        # already NCHW: no transpose, no channel slice


def reference_forward(x_nchw, w_oihw, bias, gamma, beta, eps=1e-5):
    """Pure-JAX f32 reference (NCHW) matching the PyTorch module in train mode."""
    y = lax.conv_general_dilated(
        x_nchw, w_oihw, window_strides=(1, 1), padding=((1, 1), (1, 1)),
        dimension_numbers=("NCHW", "OIHW", "NCHW"),
        precision=lax.Precision.HIGHEST,
    ) + bias[None, :, None, None]
    mean = jnp.mean(y, axis=(0, 2, 3), keepdims=True)
    var = jnp.mean((y - mean) ** 2, axis=(0, 2, 3), keepdims=True)
    yhat = (y - mean) / jnp.sqrt(var + eps)
    out = yhat * gamma[None, :, None, None] + beta[None, :, None, None]
    return jnp.maximum(out, 0.0)


if __name__ == "__main__":
    # Small shapes consistent with conv_block(in_ch=4, out_ch=8)
    N, Cin, Cout, H, W, K = 2, 4, 8, 16, 16, 3

    key = jax.random.PRNGKey(0)
    kx, kw, kb, kg, kbt = jax.random.split(key, 5)
    x = jax.random.normal(kx, (N, Cin, H, W), dtype=jnp.float32)
    w = jax.random.normal(kw, (Cout, Cin, K, K), dtype=jnp.float32) * 0.1
    b = jax.random.normal(kb, (Cout,), dtype=jnp.float32) * 0.1
    gamma = 1.0 + 0.1 * jax.random.normal(kg, (Cout,), dtype=jnp.float32)
    beta = 0.1 * jax.random.normal(kbt, (Cout,), dtype=jnp.float32)

    out = conv_block_forward(x, w, b, gamma, beta)
    out = jax.block_until_ready(out)

    ref = jax.block_until_ready(reference_forward(x, w, b, gamma, beta))
    # Tolerance loosened vs. the pure-f32 path: the kernel uses bf16 MXU inputs and a bf16
    # resident conv-output scratch (f32 accumulation and f32 BN stats).
    np.testing.assert_allclose(np.asarray(out), np.asarray(ref), rtol=2e-2, atol=2e-2)

    print("KERNEL_OK")
</pallas_src>

<mosaic_0001>
module attributes {stable_mosaic.version = 11 : i64} {
  func.func @kernel(%arg0: i32, %arg1: i32, %arg2: memref<1x36x256xbf16, #tpu.memory_space<vmem>>, %arg3: memref<128x36xbf16, #tpu.memory_space<vmem>>, %arg4: memref<128x1xf32, #tpu.memory_space<vmem>>, %arg5: memref<128x1xf32, #tpu.memory_space<vmem>>, %arg6: memref<1x8x256xf32, #tpu.memory_space<vmem>>, %arg7: memref<2x128x256xbf16, #tpu.memory_space<vmem>>, %arg8: memref<128x1xf32, #tpu.memory_space<vmem>>, %arg9: memref<128x1xf32, #tpu.memory_space<vmem>>, %arg10: memref<128x1xf32, #tpu.memory_space<vmem>>, %arg11: memref<128x1xf32, #tpu.memory_space<vmem>>) attributes {dimension_semantics = [#tpu.dimension_semantics<arbitrary>, #tpu.dimension_semantics<arbitrary>], iteration_bounds = array<i64: 2, 2>, scalar_prefetch = 0 : i64, scratch_operands = 5 : i64, tpu.core_type = #tpu.core_type<tc>, window_params = [{transform_indices = @transform_0, window_bounds = array<i64: 1, 36, 256>}, {pipeline_mode = #tpu.pipeline_mode<synchronous>, transform_indices = @transform_1, window_bounds = array<i64: 128, 36>}, {pipeline_mode = #tpu.pipeline_mode<synchronous>, transform_indices = @transform_2, window_bounds = array<i64: 128, 1>}, {pipeline_mode = #tpu.pipeline_mode<synchronous>, transform_indices = @transform_3, window_bounds = array<i64: 128, 1>}, {transform_indices = @transform_4, window_bounds = array<i64: 1, 8, 256>}]} {
    %c0_i32 = arith.constant 0 : i32
    %0 = arith.cmpi eq, %arg0, %c0_i32 : i32
    %1 = arith.extui %0 : i1 to i32
    %c0_i32_0 = arith.constant 0 : i32
    %2 = arith.cmpi ne, %1, %c0_i32_0 : i32
    scf.if %2 {
      %c0_i32_2 = arith.constant 0 : i32
      %6 = arith.cmpi eq, %arg1, %c0_i32_2 : i32
      %7 = arith.extui %6 : i1 to i32
      %c0_i32_3 = arith.constant 0 : i32
      %8 = arith.cmpi ne, %7, %c0_i32_3 : i32
      scf.if %8 {
        %cst_20 = arith.constant 0.000000e+00 : f32
        %29 = vector.broadcast %cst_20 : f32 to vector<128x1xf32>
        %c0_21 = arith.constant 0 : index
        %c0_22 = arith.constant 0 : index
        %30 = vector.load %arg8[%c0_21, %c0_22] : memref<128x1xf32, #tpu.memory_space<vmem>>, vector<128x1xf32>
        tpu.vector_store %arg8[%c0_21, %c0_22], %29 {strides = array<i32>} : memref<128x1xf32, #tpu.memory_space<vmem>>, vector<128x1xf32>,
        %cst_23 = arith.constant 0.000000e+00 : f32
        %31 = vector.broadcast %cst_23 : f32 to vector<128x1xf32>
        %c0_24 = arith.constant 0 : index
        %c0_25 = arith.constant 0 : index
        %32 = vector.load %arg9[%c0_24, %c0_25] : memref<128x1xf32, #tpu.memory_space<vmem>>, vector<128x1xf32>
        tpu.vector_store %arg9[%c0_24, %c0_25], %31 {strides = array<i32>} : memref<128x1xf32, #tpu.memory_space<vmem>>, vector<128x1xf32>,
      } else {
      }
      %c0 = arith.constant 0 : index
      %c0_4 = arith.constant 0 : index
      %9 = vector.load %arg3[%c0, %c0_4] : memref<128x36xbf16, #tpu.memory_space<vmem>>, vector<128x36xbf16>
      %c0_5 = arith.constant 0 : index
      %c0_6 = arith.constant 0 : index
      %c0_7 = arith.constant 0 : index
      %10 = vector.load %arg2[%c0_5, %c0_6, %c0_7] : memref<1x36x256xbf16, #tpu.memory_space<vmem>>, vector<1x36x256xbf16>
      %11 = vector.shape_cast %10 : vector<1x36x256xbf16> to vector<36x256xbf16>
      %cst = arith.constant dense<0.000000e+00> : vector<128x256xf32>
      %12 = tpu.matmul %9, %11, %cst {dimension_numbers = #tpu.dot_dimension_numbers<[1], [0], [0], [1], [0, 0, 1, 1], [], []>} : vector<128x36xbf16>, vector<36x256xbf16>, vector<128x256xf32> -> vector<128x256xf32>
      %13 = arith.truncf %12 : vector<128x256xf32> to vector<128x256xbf16>
      %14 = arith.index_cast %arg1 : i32 to index
      %c0_8 = arith.constant 0 : index
      %c0_9 = arith.constant 0 : index
      %15 = vector.load %arg7[%14, %c0_8, %c0_9] : memref<2x128x256xbf16, #tpu.memory_space<vmem>>, vector<1x128x256xbf16>
      %16 = vector.shape_cast %15 : vector<1x128x256xbf16> to vector<128x256xbf16>
      %17 = vector.shape_cast %13 : vector<128x256xbf16> to vector<1x128x256xbf16>
      tpu.vector_store %arg7[%14, %c0_8, %c0_9], %17 {strides = array<i32>} : memref<2x128x256xbf16, #tpu.memory_space<vmem>>, vector<1x128x256xbf16>,
      %c0_10 = arith.constant 0 : index
      %c0_11 = arith.constant 0 : index
      %18 = vector.load %arg8[%c0_10, %c0_11] : memref<128x1xf32, #tpu.memory_space<vmem>>, vector<128x1xf32>
      %cst_12 = arith.constant dense<0.000000e+00> : vector<128xf32>
      %19 = vector.multi_reduction <add>, %12, %cst_12 [1] : vector<128x256xf32> to vector<128xf32>
      %20 = vector.shape_cast %19 : vector<128xf32> to vector<128x1xf32>
      %21 = arith.addf %18, %20 : vector<128x1xf32>
      %c0_13 = arith.constant 0 : index
      %c0_14 = arith.constant 0 : index
      %22 = vector.load %arg8[%c0_13, %c0_14] : memref<128x1xf32, #tpu.memory_space<vmem>>, vector<128x1xf32>
      tpu.vector_store %arg8[%c0_13, %c0_14], %21 {strides = array<i32>} : memref<128x1xf32, #tpu.memory_space<vmem>>, vector<128x1xf32>,
      %c0_15 = arith.constant 0 : index
      %c0_16 = arith.constant 0 : index
      %23 = vector.load %arg9[%c0_15, %c0_16] : memref<128x1xf32, #tpu.memory_space<vmem>>, vector<128x1xf32>
      %24 = arith.mulf %12, %12 : vector<128x256xf32>
      %cst_17 = arith.constant dense<0.000000e+00> : vector<128xf32>
      %25 = vector.multi_reduction <add>, %24, %cst_17 [1] : vector<128x256xf32> to vector<128xf32>
      %26 = vector.shape_cast %25 : vector<128xf32> to vector<128x1xf32>
      %27 = arith.addf %23, %26 : vector<128x1xf32>
      %c0_18 = arith.constant 0 : index
      %c0_19 = arith.constant 0 : index
      %28 = vector.load %arg9[%c0_18, %c0_19] : memref<128x1xf32, #tpu.memory_space<vmem>>, vector<128x1xf32>
      tpu.vector_store %arg9[%c0_18, %c0_19], %27 {strides = array<i32>} : memref<128x1xf32, #tpu.memory_space<vmem>>, vector<128x1xf32>,
    } else {
    }
    %c1_i32 = arith.constant 1 : i32
    %3 = arith.cmpi eq, %arg0, %c1_i32 : i32
    %4 = arith.extui %3 : i1 to i32
    %c0_i32_1 = arith.constant 0 : i32
    %5 = arith.cmpi ne, %4, %c0_i32_1 : i32
    scf.if %5 {
      %c0_i32_2 = arith.constant 0 : i32
      %6 = arith.cmpi eq, %arg1, %c0_i32_2 : i32
      %7 = arith.extui %6 : i1 to i32
      %c0_i32_3 = arith.constant 0 : i32
      %8 = arith.cmpi ne, %7, %c0_i32_3 : i32
      scf.if %8 {
        %c0_12 = arith.constant 0 : index
        %c0_13 = arith.constant 0 : index
        %25 = vector.load %arg8[%c0_12, %c0_13] : memref<128x1xf32, #tpu.memory_space<vmem>>, vector<128x1xf32>
        %cst_14 = arith.constant 0.001953125 : f32
        %26 = vector.broadcast %cst_14 : f32 to vector<128x1xf32>
        %27 = arith.mulf %25, %26 : vector<128x1xf32>
        %c0_15 = arith.constant 0 : index
        %c0_16 = arith.constant 0 : index
        %28 = vector.load %arg9[%c0_15, %c0_16] : memref<128x1xf32, #tpu.memory_space<vmem>>, vector<128x1xf32>
        %cst_17 = arith.constant 0.001953125 : f32
        %29 = vector.broadcast %cst_17 : f32 to vector<128x1xf32>
        %30 = arith.mulf %28, %29 : vector<128x1xf32>
        %31 = arith.mulf %27, %27 : vector<128x1xf32>
        %32 = arith.subf %30, %31 : vector<128x1xf32>
        %cst_18 = arith.constant 0.000000e+00 : f32
        %33 = vector.broadcast %cst_18 : f32 to vector<128x1xf32>
        %34 = arith.maximumf %32, %33 : vector<128x1xf32>
        %c0_19 = arith.constant 0 : index
        %c0_20 = arith.constant 0 : index
        %35 = vector.load %arg4[%c0_19, %c0_20] : memref<128x1xf32, #tpu.memory_space<vmem>>, vector<128x1xf32>
        %cst_21 = arith.constant 9.99999974E-6 : f32
        %36 = vector.broadcast %cst_21 : f32 to vector<128x1xf32>
        %37 = arith.addf %34, %36 : vector<128x1xf32>
        %38 = math.rsqrt %37 : vector<128x1xf32>
        %39 = arith.mulf %35, %38 : vector<128x1xf32>
        %c0_22 = arith.constant 0 : index
        %c0_23 = arith.constant 0 : index
        %40 = vector.load %arg10[%c0_22, %c0_23] : memref<128x1xf32, #tpu.memory_space<vmem>>, vector<128x1xf32>
        tpu.vector_store %arg10[%c0_22, %c0_23], %39 {strides = array<i32>} : memref<128x1xf32, #tpu.memory_space<vmem>>, vector<128x1xf32>,
        %c0_24 = arith.constant 0 : index
        %c0_25 = arith.constant 0 : index
        %41 = vector.load %arg5[%c0_24, %c0_25] : memref<128x1xf32, #tpu.memory_space<vmem>>, vector<128x1xf32>
        %42 = arith.mulf %27, %39 : vector<128x1xf32>
        %43 = arith.subf %41, %42 : vector<128x1xf32>
        %c0_26 = arith.constant 0 : index
        %c0_27 = arith.constant 0 : index
        %44 = vector.load %arg11[%c0_26, %c0_27] : memref<128x1xf32, #tpu.memory_space<vmem>>, vector<128x1xf32>
        tpu.vector_store %arg11[%c0_26, %c0_27], %43 {strides = array<i32>} : memref<128x1xf32, #tpu.memory_space<vmem>>, vector<128x1xf32>,
      } else {
      }
      %9 = arith.index_cast %arg1 : i32 to index
      %c0 = arith.constant 0 : index
      %c0_4 = arith.constant 0 : index
      %10 = vector.load %arg7[%9, %c0, %c0_4] : memref<2x128x256xbf16, #tpu.memory_space<vmem>>, vector<1x128x256xbf16>
      %11 = vector.shape_cast %10 : vector<1x128x256xbf16> to vector<128x256xbf16>
      %12 = arith.extf %11 : vector<128x256xbf16> to vector<128x256xf32>
      %c0_5 = arith.constant 0 : index
      %c0_6 = arith.constant 0 : index
      %13 = vector.load %arg10[%c0_5, %c0_6] : memref<128x1xf32, #tpu.memory_space<vmem>>, vector<128x1xf32>
      %14 = vector.broadcast %13 : vector<128x1xf32> to vector<128x256xf32>
      %15 = arith.mulf %12, %14 : vector<128x256xf32>
      %c0_7 = arith.constant 0 : index
      %c0_8 = arith.constant 0 : index
      %16 = vector.load %arg11[%c0_7, %c0_8] : memref<128x1xf32, #tpu.memory_space<vmem>>, vector<128x1xf32>
      %17 = vector.broadcast %16 : vector<128x1xf32> to vector<128x256xf32>
      %18 = arith.addf %15, %17 : vector<128x256xf32>
      %cst = arith.constant 0.000000e+00 : f32
      %19 = vector.broadcast %cst : f32 to vector<128x256xf32>
      %20 = arith.maximumf %18, %19 : vector<128x256xf32>
      %21 = vector.extract_strided_slice %20 {offsets = [0, 0], sizes = [8, 256], strides = [1, 1]} : vector<128x256xf32> to vector<8x256xf32>
      %c0_9 = arith.constant 0 : index
      %c0_10 = arith.constant 0 : index
      %c0_11 = arith.constant 0 : index
      %22 = vector.load %arg6[%c0_9, %c0_10, %c0_11] : memref<1x8x256xf32, #tpu.memory_space<vmem>>, vector<1x8x256xf32>
      %23 = vector.shape_cast %22 : vector<1x8x256xf32> to vector<8x256xf32>
      %24 = vector.shape_cast %21 : vector<8x256xf32> to vector<1x8x256xf32>
      tpu.vector_store %arg6[%c0_9, %c0_10, %c0_11], %24 {strides = array<i32>} : memref<1x8x256xf32, #tpu.memory_space<vmem>>, vector<1x8x256xf32>,
    } else {
    }
    return
  }
  func.func @transform_0(%arg0: i32, %arg1: i32) -> (i32, i32, i32) {
    %c0_i32 = arith.constant 0 : i32
    %0 = arith.cmpi eq, %arg0, %c0_i32 : i32
    %c1_i32 = arith.constant 1 : i32
    %1 = arith.select %0, %arg1, %c1_i32 : i32
    %c0_i32_0 = arith.constant 0 : i32
    %c0_i32_1 = arith.constant 0 : i32
    %c0_i32_2 = arith.constant 0 : i32
    return %1, %c0_i32_0, %c0_i32_1 : i32, i32, i32
  }
  func.func @transform_1(%arg0: i32, %arg1: i32) -> (i32, i32) {
    %c0_i32 = arith.constant 0 : i32
    %c0_i32_0 = arith.constant 0 : i32
    %c0_i32_1 = arith.constant 0 : i32
    return %c0_i32, %c0_i32_0 : i32, i32
  }
  func.func @transform_2(%arg0: i32, %arg1: i32) -> (i32, i32) {
    %c0_i32 = arith.constant 0 : i32
    %c0_i32_0 = arith.constant 0 : i32
    %c0_i32_1 = arith.constant 0 : i32
    return %c0_i32, %c0_i32_0 : i32, i32
  }
  func.func @transform_3(%arg0: i32, %arg1: i32) -> (i32, i32) {
    %c0_i32 = arith.constant 0 : i32
    %c0_i32_0 = arith.constant 0 : i32
    %c0_i32_1 = arith.constant 0 : i32
    return %c0_i32, %c0_i32_0 : i32, i32
  }
  func.func @transform_4(%arg0: i32, %arg1: i32) -> (i32, i32, i32) {
    %0 = arith.muli %arg1, %arg0 : i32
    %c0_i32 = arith.constant 0 : i32
    %c0_i32_0 = arith.constant 0 : i32
    %c0_i32_1 = arith.constant 0 : i32
    return %0, %c0_i32, %c0_i32_0 : i32, i32, i32
  }
}

</mosaic_0001>

<llo_original>
// kernel: tpu_custom_call.1
$region0: #{tpu_custom_call.1}
  #allocation0 [shape = 'u32[]', space=smem, size = 0x4, offset = 0x4, fixed_abs, tag = 'smem constant byte address 0x4 - core index']
  #allocation1 [shape = 'u32[72,128]{1,0:T(1,128)}', space=vmem, size = 0x9000, scoped, tag = 'internal scratch']
  #allocation2 [shape = 'bf16[2,128,256]{2,1,0:T(8,128)(2,1)}', space=vmem, size = 0x20000, scoped, tag = 'scratch operand']
  #allocation3 [shape = 'f32[128,1]{1,0:T(8,128)}', space=vmem, size = 0x10000, scoped, tag = 'scratch operand']
  #allocation4 [shape = 'f32[128,1]{1,0:T(8,128)}', space=vmem, size = 0x10000, scoped, tag = 'scratch operand']
  #allocation5 [shape = 'f32[128,1]{1,0:T(8,128)}', space=vmem, size = 0x10000, scoped, tag = 'scratch operand']
  #allocation6 [shape = 'f32[128,1]{1,0:T(8,128)}', space=vmem, size = 0x10000, scoped, tag = 'scratch operand']
  %s0 = inlined_call_operand.vmem [shape: bf16[2,36,256], index: 0, kind: input, shape index: {}]
  %s1 = inlined_call_operand.vmem [shape: bf16[128,36], index: 1, kind: input, shape index: {}]
  %s2 = inlined_call_operand.vmem [shape: f32[128,1], index: 2, kind: input, shape index: {}]
  %s3 = inlined_call_operand.vmem [shape: f32[128,1], index: 3, kind: input, shape index: {}]
  %s4 = inlined_call_operand.hbm [shape: f32[2,8,256], index: 4, kind: output, shape index: {}]
  %s5 = sld [smem:[#allocation0]]
  $region65: #{tpu_custom_call.1} parent=0
    _
  %s7 = ssub.s32 1, %s5
  %s8 = scalar_select 0, %s7, %s5
  $region1: #{tpu_custom_call.1} parent=0
    #allocation7 [shape = 'u8[16384]{0}', space=vmem, size = 0x4000, scoped, tag = 'output window, operand 0']
    #allocation8 [shape = 's32[2]{0}', space=sflag, size = 0x8, scoped, tag = 'scoped memory for tpu_custom_call.1']
    %9 = vsyncpa [#allocation8], 0
    %s10 = scalar_lea.sflag [#allocation8], 1
    %11 = vsyncpa %s10, 0
    loop: start=0, step=1, limit=6
    $region2: #{tpu_custom_call.1} parent=1 // loop_pre_header
      _
    $region3: #{tpu_custom_call.1} parent=1 // loop_header
      %s13 = sphi 0, %s17
      %p14 = scmp.ge.s32.totalorder %s13, 6
      %s20 = sphi 0, %s32
      %s21 = sphi 0, %s28
      %s22 = sphi 0, %s20
      %s23 = sphi 0, %s21
      %s24 = sphi 0, %s22
      %s25 = sphi 0, %s23
      %s39 = sphi 0, %s41
      %s42 = sphi 0, %s39
      %s43 = sphi 0, %s42
      %s59 = sphi 0, %s43
      %s63 = sphi 0, %s63
      %s65 = sphi 0, %s63
      %s66 = sphi 0, %s65
      %s80 = sphi 0, %s66
      %s84 = sphi 0, %s84
      %s86 = sphi 0, %s84
      %s87 = sphi 0, %s86
      %s101 = sphi 0, %s87
      %s105 = sphi 0, %s105
      %s107 = sphi 0, %s105
      %s108 = sphi 0, %s107
      %s122 = sphi 0, %s108
      %s130 = sphi 0, %s132
      %s133 = sphi 0, %s130
      %s134 = sphi 0, %s133
      %s150 = sphi 0, %s134
    $region4: #{tpu_custom_call.1} parent=1 // loop_header_branch
      %16 = sbr.rel (%p14) target = $region8
    $region5: #{tpu_custom_call.1} parent=1 // loop_body
      %s18 = ssub.s32 %s13, 1
      %s19 = ssub.s32 %s13, 2
      %s26 = sadd.s32 1, %s21
      %p27 = scmp.ge.s32.totalorder %s26, 2
      %s28 = scalar_select %p27, 0, %s26
      %s29 = sadd.s32 1, %s20
      %s30 = scalar_select %p27, %s29, %s20
      %p31 = scmp.ge.s32.totalorder %s30, 2
      %s32 = scalar_select %p31, 0, %s30
      %p33 = scmp.eq.s32.totalorder %s20, 0
      %s34 = scalar_select %p33, %s21, 1
      %p35 = scmp.eq.s32.totalorder %s32, 0
      %s36 = scalar_select %p35, %s28, 1
      %s37 = ssub.s32 %s34, %s36
      %p38 = scmp.eq.s32.totalorder %s37, 0
      %s40 = sadd.s32 %s39, 1
      %s41 = scalar_select %p38, %s39, %s40
      %p44 = pneg %p38
      %p45 = scmp.eq.s32.totalorder %s13, 3
      %p46 = por %p44, %p45
      %p47 = scmp.ne.s32.totalorder %s39, %s42
      %p48 = scmp.eq.s32.totalorder %s13, 0
      %p49 = por %p47, %p48
      %p50 = scmp.ne.s32.totalorder %s39, %s42
      %p51 = scmp.eq.s32.totalorder %s18, 3
      %p52 = por %p50, %p51
      %p53 = scmp.ne.s32.totalorder %s42, %s43
      %p54 = scmp.eq.s32.totalorder %s18, 0
      %p55 = por %p53, %p54
      %p56 = scmp.ne.s32.totalorder %s42, %s43
      %p57 = scmp.eq.s32.totalorder %s19, 3
      %p58 = por %p56, %p57
      %p60 = scmp.ne.s32.totalorder %s43, %s59
      %p61 = scmp.eq.s32.totalorder %s19, 0
      %p62 = por %p60, %p61
      %s64 = sadd.s32 %s63, 1
      %p67 = scmp.eq.s32.totalorder %s13, 3
      %p68 = scmp.ne.s32.totalorder %s63, %s65
      %p69 = scmp.eq.s32.totalorder %s13, 0
      %p70 = por %p68, %p69
      %p71 = scmp.ne.s32.totalorder %s63, %s65
      %p72 = scmp.eq.s32.totalorder %s18, 3
      %p73 = por %p71, %p72
      %p74 = scmp.ne.s32.totalorder %s65, %s66
      %p75 = scmp.eq.s32.totalorder %s18, 0
      %p76 = por %p74, %p75
      %p77 = scmp.ne.s32.totalorder %s65, %s66
      %p78 = scmp.eq.s32.totalorder %s19, 3
      %p79 = por %p77, %p78
      %p81 = scmp.ne.s32.totalorder %s66, %s80
      %p82 = scmp.eq.s32.totalorder %s19, 0
      %p83 = por %p81, %p82
      %s85 = sadd.s32 %s84, 1
      %p88 = scmp.eq.s32.totalorder %s13, 3
      %p89 = scmp.ne.s32.totalorder %s84, %s86
      %p90 = scmp.eq.s32.totalorder %s13, 0
      %p91 = por %p89, %p90
      %p92 = scmp.ne.s32.totalorder %s84, %s86
      %p93 = scmp.eq.s32.totalorder %s18, 3
      %p94 = por %p92, %p93
      %p95 = scmp.ne.s32.totalorder %s86, %s87
      %p96 = scmp.eq.s32.totalorder %s18, 0
      %p97 = por %p95, %p96
      %p98 = scmp.ne.s32.totalorder %s86, %s87
      %p99 = scmp.eq.s32.totalorder %s19, 3
      %p100 = por %p98, %p99
      %p102 = scmp.ne.s32.totalorder %s87, %s101
      %p103 = scmp.eq.s32.totalorder %s19, 0
      %p104 = por %p102, %p103
      %s106 = sadd.s32 %s105, 1
      %p109 = scmp.eq.s32.totalorder %s13, 3
      %p110 = scmp.ne.s32.totalorder %s105, %s107
      %p111 = scmp.eq.s32.totalorder %s13, 0
      %p112 = por %p110, %p111
      %p113 = scmp.ne.s32.totalorder %s105, %s107
      %p114 = scmp.eq.s32.totalorder %s18, 3
      %p115 = por %p113, %p114
      %p116 = scmp.ne.s32.totalorder %s107, %s108
      %p117 = scmp.eq.s32.totalorder %s18, 0
      %p118 = por %p116, %p117
      %p119 = scmp.ne.s32.totalorder %s107, %s108
      %p120 = scmp.eq.s32.totalorder %s19, 3
      %p121 = por %p119, %p120
      %p123 = scmp.ne.s32.totalorder %s108, %s122
      %p124 = scmp.eq.s32.totalorder %s19, 0
      %p125 = por %p123, %p124
      %s126 = smul.u32 %s21, %s20
      %s127 = smul.u32 %s28, %s32
      %s128 = ssub.s32 %s126, %s127
      %p129 = scmp.eq.s32.totalorder %s128, 0
      %s131 = sadd.s32 %s130, 1
      %s132 = scalar_select %p129, %s130, %s131
      %p135 = pneg %p129
      %p136 = scmp.eq.s32.totalorder %s13, 3
      %p137 = por %p135, %p136
      %p138 = scmp.ne.s32.totalorder %s130, %s133
      %p139 = scmp.eq.s32.totalorder %s13, 0
      %p140 = por %p138, %p139
      %p141 = scmp.ne.s32.totalorder %s130, %s133
      %p142 = scmp.eq.s32.totalorder %s18, 3
      %p143 = por %p141, %p142
      %p144 = scmp.ne.s32.totalorder %s133, %s134
      %p145 = scmp.eq.s32.totalorder %s18, 0
      %p146 = por %p144, %p145
      %p147 = scmp.ne.s32.totalorder %s133, %s134
      %p148 = scmp.eq.s32.totalorder %s19, 3
      %p149 = por %p147, %p148
      %p151 = scmp.ne.s32.totalorder %s134, %s150
      %p152 = scmp.eq.s32.totalorder %s19, 0
      %p153 = por %p151, %p152
      %p154 = scmp.le.s32.totalorder 1, %s13
      %p155 = scmp.lt.s32.totalorder %s13, 5
      %p156 = pnand %p154, %p155
      %p157 = pneg %p156
      // Predicated region
      $region9: #{tpu_custom_call.1} parent=5 // pred_check
        _
      $region10: #{tpu_custom_call.1} parent=5 // pred_check_branch
        %159 = sbr.rel (%p156) target = $region12
      $region11: #{tpu_custom_call.1} parent=5 // pred_region
        %s160 = ssub.s32 %s13, 1
        // Predicated region
        $region13: #{tpu_custom_call.1} parent=11 // pred_check
          %p161 = pneg %p76
        $region14: #{tpu_custom_call.1} parent=11 // pred_check_branch
          %163 = sbr.rel (%p161) target = $region16
        $region15: #{tpu_custom_call.1} parent=11 // pred_region
          _
        $region16: #{tpu_custom_call.1} parent=11 // pred_fallthru
          _
        // Predicated region
        $region17: #{tpu_custom_call.1} parent=11 // pred_check
          %p164 = pneg %p97
        $region18: #{tpu_custom_call.1} parent=11 // pred_check_branch
          %166 = sbr.rel (%p164) target = $region20
        $region19: #{tpu_custom_call.1} parent=11 // pred_region
          _
        $region20: #{tpu_custom_call.1} parent=11 // pred_fallthru
          _
        // Predicated region
        $region21: #{tpu_custom_call.1} parent=11 // pred_check
          %p167 = pneg %p118
        $region22: #{tpu_custom_call.1} parent=11 // pred_check_branch
          %169 = sbr.rel (%p167) target = $region24
        $region23: #{tpu_custom_call.1} parent=11 // pred_region
          _
        $region24: #{tpu_custom_call.1} parent=11 // pred_fallthru
          _
      $region12: #{tpu_custom_call.1} parent=5 // pred_fallthru
        _
      %p170 = scmp.lt.s32.totalorder %s13, 4
      // Predicated region
      $region25: #{tpu_custom_call.1} parent=5 // pred_check
        %p171 = pneg %p170
      $region26: #{tpu_custom_call.1} parent=5 // pred_check_branch
        %173 = sbr.rel (%p171) target = $region28
      $region27: #{tpu_custom_call.1} parent=5 // pred_region
        // Predicated region
        $region29: #{tpu_custom_call.1} parent=27 // pred_check
          %p174 = pneg %p49
        $region30: #{tpu_custom_call.1} parent=27 // pred_check_branch
          %176 = sbr.rel (%p174) target = $region32
        $region31: #{tpu_custom_call.1} parent=27 // pred_region
          %p177 = scmp.eq.s32.totalorder %s20, 0
          %s178 = scalar_select %p177, %s21, 1
          %p179 = scmp.lt.s32.totalorder %s178, 1
          %s180 = scalar_select %p179, %s178, 1
          %s181 = smul.addr %s180, 10
          %s182 = smul.addr %s181, 4
          %s183 = scalar_lea.vmem %s0, %s182
          %p184 = scmp.eq.s32.totalorder %s20, 0
          %s185 = scalar_select %p184, %s21, 1
        $region32: #{tpu_custom_call.1} parent=27 // pred_fallthru
          _
      $region28: #{tpu_custom_call.1} parent=5 // pred_fallthru
        _
      %p186 = scmp.le.s32.totalorder 1, %s13
      %p187 = scmp.lt.s32.totalorder %s13, 5
      %p188 = pnand %p186, %p187
      %p189 = pneg %p188
      // Predicated region
      $region33: #{tpu_custom_call.1} parent=5 // pred_check
        _
      $region34: #{tpu_custom_call.1} parent=5 // pred_check_branch
        %191 = sbr.rel (%p188) target = $region36
      $region35: #{tpu_custom_call.1} parent=5 // pred_region
        %s192 = ssub.s32 %s13, 1
        %p193 = scmp.eq.s32.totalorder %s22, 0
        %s194 = scalar_select %p193, %s23, 1
        %p195 = scmp.lt.s32.totalorder %s194, 1
        %s196 = scalar_select %p195, %s194, 1
        %s197 = smul.addr %s196, 10
        %s198 = smul.addr %s197, 4
        %s199 = scalar_lea.vmem %s0, %s198
        %p200 = pneg %p55
        %p201 = pneg %p52
        %p202 = pneg %p76
        %p203 = pneg %p73
        %p204 = pneg %p97
        %p205 = pneg %p94
        %p206 = pneg %p118
        %p207 = pneg %p115
        %p208 = pneg %p146
        %p209 = pneg %p143
        %s210 = sand.u32 %s133, 1
        %s211 = scalar_lea.sflag [#allocation8], %s210
        %s212 = sand.u32 %s133, 1
        %s213 = smul.addr %s212, 16
        %s214 = scalar_lea.vmem [#allocation7], %s213
        %p215 = scmp.eq.s32.totalorder %s22, 0
        %s216 = scalar_select %p215, %s23, 1
        %p217 = scmp.lt.s32.totalorder %s216, 1
        %s218 = scalar_select %p217, %s216, 1
        %s219 = smul.addr %s218, 10
        %s220 = smul.addr %s219, 4
        %s221 = scalar_lea.vmem %s0, %s220
        %p222 = scmp.eq.s32.totalorder %s22, 0
        %s223 = scalar_select %p222, %s23, 1
        %s224 = smul.u32 %s23, %s22
        %p226 = scmp.eq.s32.totalorder %s22, 0
        // Predicated region
        $region37: #{tpu_custom_call.1} parent=35 // pred_check
          %p227 = pneg %p226
        $region38: #{tpu_custom_call.1} parent=35 // pred_check_branch
          %229 = sbr.rel (%p227) target = $region40
        $region39: #{tpu_custom_call.1} parent=35 // pred_region
          %p230 = scmp.eq.s32.totalorder %s23, 0
          // Predicated region
          $region41: #{tpu_custom_call.1} parent=39 // pred_check
            %p231 = pneg %p230
          $region42: #{tpu_custom_call.1} parent=39 // pred_check_branch
            %233 = sbr.rel (%p231) target = $region44
          $region43: #{tpu_custom_call.1} parent=39 // pred_region
            %vm234 = vcmask 7168
            %235 = vst.msk [vmem:[#allocation3] sm:$0xff] %vm234, 0.0
            %236 = vst.msk [vmem:[#allocation3 + $0x8] sm:$0xff] %vm234, 0.0
            %237 = vst.msk [vmem:[#allocation3 + $0x10] sm:$0xff] %vm234, 0.0
            %238 = vst.msk [vmem:[#allocation3 + $0x18] sm:$0xff] %vm234, 0.0
            %239 = vst.msk [vmem:[#allocation3 + $0x20] sm:$0xff] %vm234, 0.0
            %240 = vst.msk [vmem:[#allocation3 + $0x28] sm:$0xff] %vm234, 0.0
            %241 = vst.msk [vmem:[#allocation3 + $0x30] sm:$0xff] %vm234, 0.0
            %242 = vst.msk [vmem:[#allocation3 + $0x38] sm:$0xff] %vm234, 0.0
            %243 = vst.msk [vmem:[#allocation3 + $0x40] sm:$0xff] %vm234, 0.0
            %244 = vst.msk [vmem:[#allocation3 + $0x48] sm:$0xff] %vm234, 0.0
            %245 = vst.msk [vmem:[#allocation3 + $0x50] sm:$0xff] %vm234, 0.0
            %246 = vst.msk [vmem:[#allocation3 + $0x58] sm:$0xff] %vm234, 0.0
            %247 = vst.msk [vmem:[#allocation3 + $0x60] sm:$0xff] %vm234, 0.0
            %248 = vst.msk [vmem:[#allocation3 + $0x68] sm:$0xff] %vm234, 0.0
            %249 = vst.msk [vmem:[#allocation3 + $0x70] sm:$0xff] %vm234, 0.0
            %250 = vst.msk [vmem:[#allocation3 + $0x78] sm:$0xff] %vm234, 0.0
            %251 = vst.msk [vmem:[#allocation4] sm:$0xff] %vm234, 0.0
            %252 = vst.msk [vmem:[#allocation4 + $0x8] sm:$0xff] %vm234, 0.0
            %253 = vst.msk [vmem:[#allocation4 + $0x10] sm:$0xff] %vm234, 0.0
            %254 = vst.msk [vmem:[#allocation4 + $0x18] sm:$0xff] %vm234, 0.0
            %255 = vst.msk [vmem:[#allocation4 + $0x20] sm:$0xff] %vm234, 0.0
            %256 = vst.msk [vmem:[#allocation4 + $0x28] sm:$0xff] %vm234, 0.0
            %257 = vst.msk [vmem:[#allocation4 + $0x30] sm:$0xff] %vm234, 0.0
            %258 = vst.msk [vmem:[#allocation4 + $0x38] sm:$0xff] %vm234, 0.0
            %259 = vst.msk [vmem:[#allocation4 + $0x40] sm:$0xff] %vm234, 0.0
            %260 = vst.msk [vmem:[#allocation4 + $0x48] sm:$0xff] %vm234, 0.0
            %261 = vst.msk [vmem:[#allocation4 + $0x50] sm:$0xff] %vm234, 0.0
            %262 = vst.msk [vmem:[#allocation4 + $0x58] sm:$0xff] %vm234, 0.0
            %263 = vst.msk [vmem:[#allocation4 + $0x60] sm:$0xff] %vm234, 0.0
            %264 = vst.msk [vmem:[#allocation4 + $0x68] sm:$0xff] %vm234, 0.0
            %265 = vst.msk [vmem:[#allocation4 + $0x70] sm:$0xff] %vm234, 0.0
            %266 = vst.msk [vmem:[#allocation4 + $0x78] sm:$0xff] %vm234, 0.0
          $region44: #{tpu_custom_call.1} parent=39 // pred_fallthru
            _
          %v267 = vld [vmem:[%s1] sm:$0xf]
          %v268 = vld [vmem:[%s1 + $0x4] sm:$0xf]
          %v269 = vld [vmem:[%s1 + $0x8] sm:$0xf]
          %v270 = vld [vmem:[%s1 + $0xc] sm:$0xf]
          %v271 = vld [vmem:[%s1 + $0x10] sm:$0xf]
          %v272 = vld [vmem:[%s1 + $0x14] sm:$0xf]
          %v273 = vld [vmem:[%s1 + $0x18] sm:$0xf]
          %v274 = vld [vmem:[%s1 + $0x1c] sm:$0xf]
          %v275 = vld [vmem:[%s1 + $0x20] sm:$0xf]
          %v276 = vld [vmem:[%s1 + $0x24] sm:$0xf]
          %v277 = vld [vmem:[%s1 + $0x28] sm:$0xf]
          %v278 = vld [vmem:[%s1 + $0x2c] sm:$0xf]
          %v279 = vld [vmem:[%s1 + $0x30] sm:$0xf]
          %v280 = vld [vmem:[%s1 + $0x34] sm:$0xf]
          %v281 = vld [vmem:[%s1 + $0x38] sm:$0xf]
          %v282 = vld [vmem:[%s1 + $0x3c] sm:$0xf]
          %v283 = vld [vmem:[%s221] sm:$0xff]
          %v284 = vld [vmem:[%s221 + $0x8] sm:$0xff]
          %v285 = vld [vmem:[%s221 + $0x10] sm:$0xff]
          %v286 = vld [vmem:[%s221 + $0x18] sm:$0xff]
          %v287 = vld [vmem:[%s221 + $0x20] sm:$0x33]
          %v304 = vunpack.c.l.b16 %v267
          %v305 = vunpack.c.l.b16 %v268
          %v306 = vunpack.c.l.b16 %v269
          %v307 = vunpack.c.l.b16 %v270
          %v308 = vunpack.c.l.b16 %v271
          %v309 = vunpack.c.l.b16 %v272
          %v310 = vunpack.c.l.b16 %v273
          %v311 = vunpack.c.l.b16 %v274
          %v312 = vunpack.c.l.b16 %v275
          %v313 = vunpack.c.l.b16 %v276
          %v314 = vunpack.c.l.b16 %v277
          %v315 = vunpack.c.l.b16 %v278
          %v316 = vunpack.c.l.b16 %v279
          %v317 = vunpack.c.l.b16 %v280
          %v318 = vunpack.c.l.b16 %v281
          %v319 = vunpack.c.l.b16 %v282
          %v320 = vpack.c.b16 %v305, %v304
          %v321 = vpack.c.b16 %v307, %v306
          %v322 = vpack.c.b16 %v309, %v308
          %v323 = vpack.c.b16 %v311, %v310
          %v324 = vpack.c.b16 %v313, %v312
          %v325 = vpack.c.b16 %v315, %v314
          %v326 = vpack.c.b16 %v317, %v316
          %v327 = vpack.c.b16 %v319, %v318
          %v333 = vunpack.c.l.b16 %v283
          %v334 = vunpack.c.h.b16 %v283
          %v335 = vunpack.c.l.b16 %v284
          %v336 = vunpack.c.h.b16 %v284
          %v337 = vunpack.c.l.b16 %v285
          %v338 = vunpack.c.h.b16 %v285
          %v339 = vunpack.c.l.b16 %v286
          %v340 = vunpack.c.h.b16 %v286
          %v341 = vunpack.c.l.b16 %v287
          %v342 = vunpack.c.h.b16 %v287
          %v343 = vpack.c.b16 %v335, %v333
          %v344 = vpack.c.b16 %v336, %v334
          %v345 = vpack.c.b16 %v339, %v337
          %v346 = vpack.c.b16 %v340, %v338
          %v347 = vpack.c.b16 %v341, %v341
          %v348 = vpack.c.b16 %v342, %v342
          %vm353 = vcmask 293888
          %v355 = vsel %vm353, %v320, 0
          %v358 = vsel %vm353, %v321, 0
          %v361 = vsel %vm353, %v322, 0
          %v364 = vsel %vm353, %v323, 0
          %v367 = vsel %vm353, %v324, 0
          %v370 = vsel %vm353, %v325, 0
          %v373 = vsel %vm353, %v326, 0
          %v376 = vsel %vm353, %v327, 0
          %vm378 = vcmask 1041408
          %v380 = vsel %vm378, %v347, 0
          %v383 = vsel %vm378, %v348, 0
          %385 = vmatpush.bf16.msra.mxu0 0
          %386 = vmatpush.bf16.msra.mxu0 0
          %387 = vmatpush.bf16.msra.mxu0 0
          %388 = vmatpush.bf16.msra.mxu0 0
          %389 = vmatpush.bf16.msra.mxu0 0
          %390 = vmatpush.bf16.msra.mxu0 %v380
          %391 = vmatpush.bf16.msra.mxu0 %v345
          %392 = vmatpush.bf16.msra.mxu0 %v343
          %393 = vmatmul.bf16.gmra.mxu0 %v355
          %v394 = vpop.f32.mrf.mxu0
          %v395 = vadd.f32 0.0, %v394
          %v396 = vpop.f32.mrf.mxu0
          %v397 = vadd.f32 0.0, %v396
          %398 = vmatmul.bf16.gmra.mxu0 %v358
          %v399 = vpop.f32.mrf.mxu0
          %v400 = vadd.f32 0.0, %v399
          %v401 = vpop.f32.mrf.mxu0
          %v402 = vadd.f32 0.0, %v401
          %403 = vmatmul.bf16.gmra.mxu0 %v361
          %v404 = vpop.f32.mrf.mxu0
          %v405 = vadd.f32 0.0, %v404
          %v406 = vpop.f32.mrf.mxu0
          %v407 = vadd.f32 0.0, %v406
          %408 = vmatmul.bf16.gmra.mxu0 %v364
          %v409 = vpop.f32.mrf.mxu0
          %v410 = vadd.f32 0.0, %v409
          %v411 = vpop.f32.mrf.mxu0
          %v412 = vadd.f32 0.0, %v411
          %413 = vmatmul.bf16.gmra.mxu0 %v367
          %v414 = vpop.f32.mrf.mxu0
          %v415 = vadd.f32 0.0, %v414
          %v416 = vpop.f32.mrf.mxu0
          %v417 = vadd.f32 0.0, %v416
          %418 = vmatmul.bf16.gmra.mxu0 %v370
          %v419 = vpop.f32.mrf.mxu0
          %v420 = vadd.f32 0.0, %v419
          %v421 = vpop.f32.mrf.mxu0
          %v422 = vadd.f32 0.0, %v421
          %423 = vmatmul.bf16.gmra.mxu0 %v373
          %v424 = vpop.f32.mrf.mxu0
          %v425 = vadd.f32 0.0, %v424
          %v426 = vpop.f32.mrf.mxu0
          %v427 = vadd.f32 0.0, %v426
          %428 = vmatmul.bf16.gmra.mxu0 %v376
          %v429 = vpop.f32.mrf.mxu0
          %v430 = vadd.f32 0.0, %v429
          %v431 = vpop.f32.mrf.mxu0
          %v432 = vadd.f32 0.0, %v431
          %433 = vdwg.mxu0
          %434 = vmatpush.bf16.msra.mxu0 0
          %435 = vmatpush.bf16.msra.mxu0 0
          %436 = vmatpush.bf16.msra.mxu0 0
          %437 = vmatpush.bf16.msra.mxu0 0
          %438 = vmatpush.bf16.msra.mxu0 0
          %439 = vmatpush.bf16.msra.mxu0 %v383
          %440 = vmatpush.bf16.msra.mxu0 %v346
          %441 = vmatpush.bf16.msra.mxu0 %v344
          %442 = vmatmul.bf16.gmra.mxu0 %v355
          %v443 = vpop.f32.mrf.mxu0
          %v444 = vadd.f32 0.0, %v443
          %v445 = vpop.f32.mrf.mxu0
          %v446 = vadd.f32 0.0, %v445
          %447 = vmatmul.bf16.gmra.mxu0 %v358
          %v448 = vpop.f32.mrf.mxu0
          %v449 = vadd.f32 0.0, %v448
          %v450 = vpop.f32.mrf.mxu0
          %v451 = vadd.f32 0.0, %v450
          %452 = vmatmul.bf16.gmra.mxu0 %v361
          %v453 = vpop.f32.mrf.mxu0
          %v454 = vadd.f32 0.0, %v453
          %v455 = vpop.f32.mrf.mxu0
          %v456 = vadd.f32 0.0, %v455
          %457 = vmatmul.bf16.gmra.mxu0 %v364
          %v458 = vpop.f32.mrf.mxu0
          %v459 = vadd.f32 0.0, %v458
          %v460 = vpop.f32.mrf.mxu0
          %v461 = vadd.f32 0.0, %v460
          %462 = vmatmul.bf16.gmra.mxu0 %v367
          %v463 = vpop.f32.mrf.mxu0
          %v464 = vadd.f32 0.0, %v463
          %v465 = vpop.f32.mrf.mxu0
          %v466 = vadd.f32 0.0, %v465
          %467 = vmatmul.bf16.gmra.mxu0 %v370
          %v468 = vpop.f32.mrf.mxu0
          %v469 = vadd.f32 0.0, %v468
          %v470 = vpop.f32.mrf.mxu0
          %v471 = vadd.f32 0.0, %v470
          %472 = vmatmul.bf16.gmra.mxu0 %v373
          %v473 = vpop.f32.mrf.mxu0
          %v474 = vadd.f32 0.0, %v473
          %v475 = vpop.f32.mrf.mxu0
          %v476 = vadd.f32 0.0, %v475
          %477 = vmatmul.bf16.gmra.mxu0 %v376
          %v478 = vpop.f32.mrf.mxu0
          %v479 = vadd.f32 0.0, %v478
          %v480 = vpop.f32.mrf.mxu0
          %v481 = vadd.f32 0.0, %v480
          %482 = vdwg.mxu0
          %v483 = vpack.c.bf16 %v444, %v395
          %v484 = vpack.c.bf16 %v446, %v397
          %v485 = vpack.c.bf16 %v449, %v400
          %v486 = vpack.c.bf16 %v451, %v402
          %v487 = vpack.c.bf16 %v454, %v405
          %v488 = vpack.c.bf16 %v456, %v407
          %v489 = vpack.c.bf16 %v459, %v410
          %v490 = vpack.c.bf16 %v461, %v412
          %v491 = vpack.c.bf16 %v464, %v415
          %v492 = vpack.c.bf16 %v466, %v417
          %v493 = vpack.c.bf16 %v469, %v420
          %v494 = vpack.c.bf16 %v471, %v422
          %v495 = vpack.c.bf16 %v474, %v425
          %v496 = vpack.c.bf16 %v476, %v427
          %v497 = vpack.c.bf16 %v479, %v430
          %v498 = vpack.c.bf16 %v481, %v432
          %s499 = smul.u32 %s23, 32
          %s500 = smul.addr %s499, 4
          %s501 = scalar_lea.vmem [#allocation2], %s500
          %502 = vst [vmem:[%s501] sm:$0xff] %v483
          %503 = vst [vmem:[%s501 + $0x8] sm:$0xff] %v484
          %504 = vst [vmem:[%s501 + $0x10] sm:$0xff] %v485
          %505 = vst [vmem:[%s501 + $0x18] sm:$0xff] %v486
          %506 = vst [vmem:[%s501 + $0x20] sm:$0xff] %v487
          %507 = vst [vmem:[%s501 + $0x28] sm:$0xff] %v488
          %508 = vst [vmem:[%s501 + $0x30] sm:$0xff] %v489
          %509 = vst [vmem:[%s501 + $0x38] sm:$0xff] %v490
          %510 = vst [vmem:[%s501 + $0x40] sm:$0xff] %v491
          %511 = vst [vmem:[%s501 + $0x48] sm:$0xff] %v492
          %512 = vst [vmem:[%s501 + $0x50] sm:$0xff] %v493
          %513 = vst [vmem:[%s501 + $0x58] sm:$0xff] %v494
          %514 = vst [vmem:[%s501 + $0x60] sm:$0xff] %v495
          %515 = vst [vmem:[%s501 + $0x68] sm:$0xff] %v496
          %516 = vst [vmem:[%s501 + $0x70] sm:$0xff] %v497
          %517 = vst [vmem:[%s501 + $0x78] sm:$0xff] %v498
          %v518 = vld [vmem:[#allocation3] sm:$0xff]
          %v519 = vld [vmem:[#allocation3 + $0x8] sm:$0xff]
          %v520 = vld [vmem:[#allocation3 + $0x10] sm:$0xff]
          %v521 = vld [vmem:[#allocation3 + $0x18] sm:$0xff]
          %v522 = vld [vmem:[#allocation3 + $0x20] sm:$0xff]
          %v523 = vld [vmem:[#allocation3 + $0x28] sm:$0xff]
          %v524 = vld [vmem:[#allocation3 + $0x30] sm:$0xff]
          %v525 = vld [vmem:[#allocation3 + $0x38] sm:$0xff]
          %v526 = vld [vmem:[#allocation3 + $0x40] sm:$0xff]
          %v527 = vld [vmem:[#allocation3 + $0x48] sm:$0xff]
          %v528 = vld [vmem:[#allocation3 + $0x50] sm:$0xff]
          %v529 = vld [vmem:[#allocation3 + $0x58] sm:$0xff]
          %v530 = vld [vmem:[#allocation3 + $0x60] sm:$0xff]
          %v531 = vld [vmem:[#allocation3 + $0x68] sm:$0xff]
          %v532 = vld [vmem:[#allocation3 + $0x70] sm:$0xff]
          %v533 = vld [vmem:[#allocation3 + $0x78] sm:$0xff]
          %v534 = vadd.f32 %v395, %v444
          %535 = vadd.xlane.f32.xlu0 %v534
          %v536 = vpop.xlane.xlu0 %535
          %v537 = vadd.f32 %v397, %v446
          %538 = vadd.xlane.f32.xlu0 %v537
          %v539 = vpop.xlane.xlu0 %538
          %v540 = vadd.f32 %v400, %v449
          %541 = vadd.xlane.f32.xlu0 %v540
          %v542 = vpop.xlane.xlu0 %541
          %v543 = vadd.f32 %v402, %v451
          %544 = vadd.xlane.f32.xlu0 %v543
          %v545 = vpop.xlane.xlu0 %544
          %v546 = vadd.f32 %v405, %v454
          %547 = vadd.xlane.f32.xlu0 %v546
          %v548 = vpop.xlane.xlu0 %547
          %v549 = vadd.f32 %v407, %v456
          %550 = vadd.xlane.f32.xlu0 %v549
          %v551 = vpop.xlane.xlu0 %550
          %v552 = vadd.f32 %v410, %v459
          %553 = vadd.xlane.f32.xlu0 %v552
          %v554 = vpop.xlane.xlu0 %553
          %v555 = vadd.f32 %v412, %v461
          %556 = vadd.xlane.f32.xlu0 %v555
          %v557 = vpop.xlane.xlu0 %556
          %v558 = vadd.f32 %v415, %v464
          %559 = vadd.xlane.f32.xlu0 %v558
          %v560 = vpop.xlane.xlu0 %559
          %v561 = vadd.f32 %v417, %v466
          %562 = vadd.xlane.f32.xlu0 %v561
          %v563 = vpop.xlane.xlu0 %562
          %v564 = vadd.f32 %v420, %v469
          %565 = vadd.xlane.f32.xlu0 %v564
          %v566 = vpop.xlane.xlu0 %565
          %v567 = vadd.f32 %v422, %v471
          %568 = vadd.xlane.f32.xlu0 %v567
          %v569 = vpop.xlane.xlu0 %568
          %v570 = vadd.f32 %v425, %v474
          %571 = vadd.xlane.f32.xlu0 %v570
          %v572 = vpop.xlane.xlu0 %571
          %v573 = vadd.f32 %v427, %v476
          %574 = vadd.xlane.f32.xlu0 %v573
          %v575 = vpop.xlane.xlu0 %574
          %v576 = vadd.f32 %v430, %v479
          %577 = vadd.xlane.f32.xlu0 %v576
          %v578 = vpop.xlane.xlu0 %577
          %v579 = vadd.f32 %v432, %v481
          %580 = vadd.xlane.f32.xlu0 %v579
          %v581 = vpop.xlane.xlu0 %580
          %v582 = vadd.f32 %v518, %v536
          %v583 = vadd.f32 %v519, %v539
          %v584 = vadd.f32 %v520, %v542
          %v585 = vadd.f32 %v521, %v545
          %v586 = vadd.f32 %v522, %v548
          %v587 = vadd.f32 %v523, %v551
          %v588 = vadd.f32 %v524, %v554
          %v589 = vadd.f32 %v525, %v557
          %v590 = vadd.f32 %v526, %v560
          %v591 = vadd.f32 %v527, %v563
          %v592 = vadd.f32 %v528, %v566
          %v593 = vadd.f32 %v529, %v569
          %v594 = vadd.f32 %v530, %v572
          %v595 = vadd.f32 %v531, %v575
          %v596 = vadd.f32 %v532, %v578
          %v597 = vadd.f32 %v533, %v581
          %vm598 = vcmask 7168
          %599 = vst.msk [vmem:[#allocation3] sm:$0xff] %vm598, %v582
          %600 = vst.msk [vmem:[#allocation3 + $0x8] sm:$0xff] %vm598, %v583
          %601 = vst.msk [vmem:[#allocation3 + $0x10] sm:$0xff] %vm598, %v584
          %602 = vst.msk [vmem:[#allocation3 + $0x18] sm:$0xff] %vm598, %v585
          %603 = vst.msk [vmem:[#allocation3 + $0x20] sm:$0xff] %vm598, %v586
          %604 = vst.msk [vmem:[#allocation3 + $0x28] sm:$0xff] %vm598, %v587
          %605 = vst.msk [vmem:[#allocation3 + $0x30] sm:$0xff] %vm598, %v588
          %606 = vst.msk [vmem:[#allocation3 + $0x38] sm:$0xff] %vm598, %v589
          %607 = vst.msk [vmem:[#allocation3 + $0x40] sm:$0xff] %vm598, %v590
          %608 = vst.msk [vmem:[#allocation3 + $0x48] sm:$0xff] %vm598, %v591
          %609 = vst.msk [vmem:[#allocation3 + $0x50] sm:$0xff] %vm598, %v592
          %610 = vst.msk [vmem:[#allocation3 + $0x58] sm:$0xff] %vm598, %v593
          %611 = vst.msk [vmem:[#allocation3 + $0x60] sm:$0xff] %vm598, %v594
          %612 = vst.msk [vmem:[#allocation3 + $0x68] sm:$0xff] %vm598, %v595
          %613 = vst.msk [vmem:[#allocation3 + $0x70] sm:$0xff] %vm598, %v596
          %614 = vst.msk [vmem:[#allocation3 + $0x78] sm:$0xff] %vm598, %v597
          %v615 = vld [vmem:[#allocation4] sm:$0xff]
          %v616 = vld [vmem:[#allocation4 + $0x8] sm:$0xff]
          %v617 = vld [vmem:[#allocation4 + $0x10] sm:$0xff]
          %v618 = vld [vmem:[#allocation4 + $0x18] sm:$0xff]
          %v619 = vld [vmem:[#allocation4 + $0x20] sm:$0xff]
          %v620 = vld [vmem:[#allocation4 + $0x28] sm:$0xff]
          %v621 = vld [vmem:[#allocation4 + $0x30] sm:$0xff]
          %v622 = vld [vmem:[#allocation4 + $0x38] sm:$0xff]
          %v623 = vld [vmem:[#allocation4 + $0x40] sm:$0xff]
          %v624 = vld [vmem:[#allocation4 + $0x48] sm:$0xff]
          %v625 = vld [vmem:[#allocation4 + $0x50] sm:$0xff]
          %v626 = vld [vmem:[#allocation4 + $0x58] sm:$0xff]
          %v627 = vld [vmem:[#allocation4 + $0x60] sm:$0xff]
          %v628 = vld [vmem:[#allocation4 + $0x68] sm:$0xff]
          %v629 = vld [vmem:[#allocation4 + $0x70] sm:$0xff]
          %v630 = vld [vmem:[#allocation4 + $0x78] sm:$0xff]
          %v631 = vmul.f32 %v395, %v395
          %v632 = vmul.f32 %v444, %v444
          %v633 = vmul.f32 %v397, %v397
          %v634 = vmul.f32 %v446, %v446
          %v635 = vmul.f32 %v400, %v400
          %v636 = vmul.f32 %v449, %v449
          %v637 = vmul.f32 %v402, %v402
          %v638 = vmul.f32 %v451, %v451
          %v639 = vmul.f32 %v405, %v405
          %v640 = vmul.f32 %v454, %v454
          %v641 = vmul.f32 %v407, %v407
          %v642 = vmul.f32 %v456, %v456
          %v643 = vmul.f32 %v410, %v410
          %v644 = vmul.f32 %v459, %v459
          %v645 = vmul.f32 %v412, %v412
          %v646 = vmul.f32 %v461, %v461
          %v647 = vmul.f32 %v415, %v415
          %v648 = vmul.f32 %v464, %v464
          %v649 = vmul.f32 %v417, %v417
          %v650 = vmul.f32 %v466, %v466
          %v651 = vmul.f32 %v420, %v420
          %v652 = vmul.f32 %v469, %v469
          %v653 = vmul.f32 %v422, %v422
          %v654 = vmul.f32 %v471, %v471
          %v655 = vmul.f32 %v425, %v425
          %v656 = vmul.f32 %v474, %v474
          %v657 = vmul.f32 %v427, %v427
          %v658 = vmul.f32 %v476, %v476
          %v659 = vmul.f32 %v430, %v430
          %v660 = vmul.f32 %v479, %v479
          %v661 = vmul.f32 %v432, %v432
          %v662 = vmul.f32 %v481, %v481
          %v663 = vadd.f32 %v631, %v632
          %664 = vadd.xlane.f32.xlu0 %v663
          %v665 = vpop.xlane.xlu0 %664
          %v666 = vadd.f32 %v633, %v634
          %667 = vadd.xlane.f32.xlu0 %v666
          %v668 = vpop.xlane.xlu0 %667
          %v669 = vadd.f32 %v635, %v636
          %670 = vadd.xlane.f32.xlu0 %v669
          %v671 = vpop.xlane.xlu0 %670
          %v672 = vadd.f32 %v637, %v638
          %673 = vadd.xlane.f32.xlu0 %v672
          %v674 = vpop.xlane.xlu0 %673
          %v675 = vadd.f32 %v639, %v640
          %676 = vadd.xlane.f32.xlu0 %v675
          %v677 = vpop.xlane.xlu0 %676
          %v678 = vadd.f32 %v641, %v642
          %679 = vadd.xlane.f32.xlu0 %v678
          %v680 = vpop.xlane.xlu0 %679
          %v681 = vadd.f32 %v643, %v644
          %682 = vadd.xlane.f32.xlu0 %v681
          %v683 = vpop.xlane.xlu0 %682
          %v684 = vadd.f32 %v645, %v646
          %685 = vadd.xlane.f32.xlu0 %v684
          %v686 = vpop.xlane.xlu0 %685
          %v687 = vadd.f32 %v647, %v648
          %688 = vadd.xlane.f32.xlu0 %v687
          %v689 = vpop.xlane.xlu0 %688
          %v690 = vadd.f32 %v649, %v650
          %691 = vadd.xlane.f32.xlu0 %v690
          %v692 = vpop.xlane.xlu0 %691
          %v693 = vadd.f32 %v651, %v652
          %694 = vadd.xlane.f32.xlu0 %v693
          %v695 = vpop.xlane.xlu0 %694
          %v696 = vadd.f32 %v653, %v654
          %697 = vadd.xlane.f32.xlu0 %v696
          %v698 = vpop.xlane.xlu0 %697
          %v699 = vadd.f32 %v655, %v656
          %700 = vadd.xlane.f32.xlu0 %v699
          %v701 = vpop.xlane.xlu0 %700
          %v702 = vadd.f32 %v657, %v658
          %703 = vadd.xlane.f32.xlu0 %v702
          %v704 = vpop.xlane.xlu0 %703
          %v705 = vadd.f32 %v659, %v660
          %706 = vadd.xlane.f32.xlu0 %v705
          %v707 = vpop.xlane.xlu0 %706
          %v708 = vadd.f32 %v661, %v662
          %709 = vadd.xlane.f32.xlu0 %v708
          %v710 = vpop.xlane.xlu0 %709
          %v711 = vadd.f32 %v615, %v665
          %v712 = vadd.f32 %v616, %v668
          %v713 = vadd.f32 %v617, %v671
          %v714 = vadd.f32 %v618, %v674
          %v715 = vadd.f32 %v619, %v677
          %v716 = vadd.f32 %v620, %v680
          %v717 = vadd.f32 %v621, %v683
          %v718 = vadd.f32 %v622, %v686
          %v719 = vadd.f32 %v623, %v689
          %v720 = vadd.f32 %v624, %v692
          %v721 = vadd.f32 %v625, %v695
          %v722 = vadd.f32 %v626, %v698
          %v723 = vadd.f32 %v627, %v701
          %v724 = vadd.f32 %v628, %v704
          %v725 = vadd.f32 %v629, %v707
          %v726 = vadd.f32 %v630, %v710
          %727 = vst.msk [vmem:[#allocation4] sm:$0xff] %vm598, %v711
          %728 = vst.msk [vmem:[#allocation4 + $0x8] sm:$0xff] %vm598, %v712
          %729 = vst.msk [vmem:[#allocation4 + $0x10] sm:$0xff] %vm598, %v713
          %730 = vst.msk [vmem:[#allocation4 + $0x18] sm:$0xff] %vm598, %v714
          %731 = vst.msk [vmem:[#allocation4 + $0x20] sm:$0xff] %vm598, %v715
          %732 = vst.msk [vmem:[#allocation4 + $0x28] sm:$0xff] %vm598, %v716
          %733 = vst.msk [vmem:[#allocation4 + $0x30] sm:$0xff] %vm598, %v717
          %734 = vst.msk [vmem:[#allocation4 + $0x38] sm:$0xff] %vm598, %v718
          %735 = vst.msk [vmem:[#allocation4 + $0x40] sm:$0xff] %vm598, %v719
          %736 = vst.msk [vmem:[#allocation4 + $0x48] sm:$0xff] %vm598, %v720
          %737 = vst.msk [vmem:[#allocation4 + $0x50] sm:$0xff] %vm598, %v721
          %738 = vst.msk [vmem:[#allocation4 + $0x58] sm:$0xff] %vm598, %v722
          %739 = vst.msk [vmem:[#allocation4 + $0x60] sm:$0xff] %vm598, %v723
          %740 = vst.msk [vmem:[#allocation4 + $0x68] sm:$0xff] %vm598, %v724
          %741 = vst.msk [vmem:[#allocation4 + $0x70] sm:$0xff] %vm598, %v725
          %742 = vst.msk [vmem:[#allocation4 + $0x78] sm:$0xff] %vm598, %v726
        $region40: #{tpu_custom_call.1} parent=35 // pred_fallthru
          _
        %p743 = scmp.eq.s32.totalorder %s22, 1
        // Predicated region
        $region45: #{tpu_custom_call.1} parent=35 // pred_check
          %p744 = pneg %p743
        $region46: #{tpu_custom_call.1} parent=35 // pred_check_branch
          %746 = sbr.rel (%p744) target = $region48
        $region47: #{tpu_custom_call.1} parent=35 // pred_region
          %p747 = scmp.eq.s32.totalorder %s23, 0
          // Predicated region
          $region49: #{tpu_custom_call.1} parent=47 // pred_check
            %p748 = pneg %p747
          $region50: #{tpu_custom_call.1} parent=47 // pred_check_branch
            %750 = sbr.rel (%p748) target = $region52
          $region51: #{tpu_custom_call.1} parent=47 // pred_region
            %v751 = vld [vmem:[#allocation3] sm:$0xff]
            %v752 = vld [vmem:[#allocation3 + $0x8] sm:$0xff]
            %v753 = vld [vmem:[#allocation3 + $0x10] sm:$0xff]
            %v754 = vld [vmem:[#allocation3 + $0x18] sm:$0xff]
            %v755 = vld [vmem:[#allocation3 + $0x20] sm:$0xff]
            %v756 = vld [vmem:[#allocation3 + $0x28] sm:$0xff]
            %v757 = vld [vmem:[#allocation3 + $0x30] sm:$0xff]
            %v758 = vld [vmem:[#allocation3 + $0x38] sm:$0xff]
            %v759 = vld [vmem:[#allocation3 + $0x40] sm:$0xff]
            %v760 = vld [vmem:[#allocation3 + $0x48] sm:$0xff]
            %v761 = vld [vmem:[#allocation3 + $0x50] sm:$0xff]
            %v762 = vld [vmem:[#allocation3 + $0x58] sm:$0xff]
            %v763 = vld [vmem:[#allocation3 + $0x60] sm:$0xff]
            %v764 = vld [vmem:[#allocation3 + $0x68] sm:$0xff]
            %v765 = vld [vmem:[#allocation3 + $0x70] sm:$0xff]
            %v766 = vld [vmem:[#allocation3 + $0x78] sm:$0xff]
            %v767 = vmul.f32 %v751, 0.001953125
            %v768 = vmul.f32 %v752, 0.001953125
            %v769 = vmul.f32 %v753, 0.001953125
            %v770 = vmul.f32 %v754, 0.001953125
            %v771 = vmul.f32 %v755, 0.001953125
            %v772 = vmul.f32 %v756, 0.001953125
            %v773 = vmul.f32 %v757, 0.001953125
            %v774 = vmul.f32 %v758, 0.001953125
            %v775 = vmul.f32 %v759, 0.001953125
            %v776 = vmul.f32 %v760, 0.001953125
            %v777 = vmul.f32 %v761, 0.001953125
            %v778 = vmul.f32 %v762, 0.001953125
            %v779 = vmul.f32 %v763, 0.001953125
            %v780 = vmul.f32 %v764, 0.001953125
            %v781 = vmul.f32 %v765, 0.001953125
            %v782 = vmul.f32 %v766, 0.001953125
            %v783 = vld [vmem:[#allocation4] sm:$0xff]
            %v784 = vld [vmem:[#allocation4 + $0x8] sm:$0xff]
            %v785 = vld [vmem:[#allocation4 + $0x10] sm:$0xff]
            %v786 = vld [vmem:[#allocation4 + $0x18] sm:$0xff]
            %v787 = vld [vmem:[#allocation4 + $0x20] sm:$0xff]
            %v788 = vld [vmem:[#allocation4 + $0x28] sm:$0xff]
            %v789 = vld [vmem:[#allocation4 + $0x30] sm:$0xff]
            %v790 = vld [vmem:[#allocation4 + $0x38] sm:$0xff]
            %v791 = vld [vmem:[#allocation4 + $0x40] sm:$0xff]
            %v792 = vld [vmem:[#allocation4 + $0x48] sm:$0xff]
            %v793 = vld [vmem:[#allocation4 + $0x50] sm:$0xff]
            %v794 = vld [vmem:[#allocation4 + $0x58] sm:$0xff]
            %v795 = vld [vmem:[#allocation4 + $0x60] sm:$0xff]
            %v796 = vld [vmem:[#allocation4 + $0x68] sm:$0xff]
            %v797 = vld [vmem:[#allocation4 + $0x70] sm:$0xff]
            %v798 = vld [vmem:[#allocation4 + $0x78] sm:$0xff]
            %v799 = vmul.f32 %v783, 0.001953125
            %v800 = vmul.f32 %v784, 0.001953125
            %v801 = vmul.f32 %v785, 0.001953125
            %v802 = vmul.f32 %v786, 0.001953125
            %v803 = vmul.f32 %v787, 0.001953125
            %v804 = vmul.f32 %v788, 0.001953125
            %v805 = vmul.f32 %v789, 0.001953125
            %v806 = vmul.f32 %v790, 0.001953125
            %v807 = vmul.f32 %v791, 0.001953125
            %v808 = vmul.f32 %v792, 0.001953125
            %v809 = vmul.f32 %v793, 0.001953125
            %v810 = vmul.f32 %v794, 0.001953125
            %v811 = vmul.f32 %v795, 0.001953125
            %v812 = vmul.f32 %v796, 0.001953125
            %v813 = vmul.f32 %v797, 0.001953125
            %v814 = vmul.f32 %v798, 0.001953125
            %v815 = vmul.f32 %v767, %v767
            %v816 = vmul.f32 %v768, %v768
            %v817 = vmul.f32 %v769, %v769
            %v818 = vmul.f32 %v770, %v770
            %v819 = vmul.f32 %v771, %v771
            %v820 = vmul.f32 %v772, %v772
            %v821 = vmul.f32 %v773, %v773
            %v822 = vmul.f32 %v774, %v774
            %v823 = vmul.f32 %v775, %v775
            %v824 = vmul.f32 %v776, %v776
            %v825 = vmul.f32 %v777, %v777
            %v826 = vmul.f32 %v778, %v778
            %v827 = vmul.f32 %v779, %v779
            %v828 = vmul.f32 %v780, %v780
            %v829 = vmul.f32 %v781, %v781
            %v830 = vmul.f32 %v782, %v782
            %v831 = vsub.f32 %v799, %v815
            %v832 = vsub.f32 %v800, %v816
            %v833 = vsub.f32 %v801, %v817
            %v834 = vsub.f32 %v802, %v818
            %v835 = vsub.f32 %v803, %v819
            %v836 = vsub.f32 %v804, %v820
            %v837 = vsub.f32 %v805, %v821
            %v838 = vsub.f32 %v806, %v822
            %v839 = vsub.f32 %v807, %v823
            %v840 = vsub.f32 %v808, %v824
            %v841 = vsub.f32 %v809, %v825
            %v842 = vsub.f32 %v810, %v826
            %v843 = vsub.f32 %v811, %v827
            %v844 = vsub.f32 %v812, %v828
            %v845 = vsub.f32 %v813, %v829
            %v846 = vsub.f32 %v814, %v830
            %v847 = vmax.f32 %v831, 0.0
            %v848 = vmax.f32 %v832, 0.0
            %v849 = vmax.f32 %v833, 0.0
            %v850 = vmax.f32 %v834, 0.0
            %v851 = vmax.f32 %v835, 0.0
            %v852 = vmax.f32 %v836, 0.0
            %v853 = vmax.f32 %v837, 0.0
            %v854 = vmax.f32 %v838, 0.0
            %v855 = vmax.f32 %v839, 0.0
            %v856 = vmax.f32 %v840, 0.0
            %v857 = vmax.f32 %v841, 0.0
            %v858 = vmax.f32 %v842, 0.0
            %v859 = vmax.f32 %v843, 0.0
            %v860 = vmax.f32 %v844, 0.0
            %v861 = vmax.f32 %v845, 0.0
            %v862 = vmax.f32 %v846, 0.0
            %v863 = vld [vmem:[%s2] sm:$0xff]
            %v864 = vld [vmem:[%s2 + $0x8] sm:$0xff]
            %v865 = vld [vmem:[%s2 + $0x10] sm:$0xff]
            %v866 = vld [vmem:[%s2 + $0x18] sm:$0xff]
            %v867 = vld [vmem:[%s2 + $0x20] sm:$0xff]
            %v868 = vld [vmem:[%s2 + $0x28] sm:$0xff]
            %v869 = vld [vmem:[%s2 + $0x30] sm:$0xff]
            %v870 = vld [vmem:[%s2 + $0x38] sm:$0xff]
            %v871 = vld [vmem:[%s2 + $0x40] sm:$0xff]
            %v872 = vld [vmem:[%s2 + $0x48] sm:$0xff]
            %v873 = vld [vmem:[%s2 + $0x50] sm:$0xff]
            %v874 = vld [vmem:[%s2 + $0x58] sm:$0xff]
            %v875 = vld [vmem:[%s2 + $0x60] sm:$0xff]
            %v876 = vld [vmem:[%s2 + $0x68] sm:$0xff]
            %v877 = vld [vmem:[%s2 + $0x70] sm:$0xff]
            %v878 = vld [vmem:[%s2 + $0x78] sm:$0xff]
            %v879 = vadd.f32 %v847, 1e-05
            %v880 = vadd.f32 %v848, 1e-05
            %v881 = vadd.f32 %v849, 1e-05
            %v882 = vadd.f32 %v850, 1e-05
            %v883 = vadd.f32 %v851, 1e-05
            %v884 = vadd.f32 %v852, 1e-05
            %v885 = vadd.f32 %v853, 1e-05
            %v886 = vadd.f32 %v854, 1e-05
            %v887 = vadd.f32 %v855, 1e-05
            %v888 = vadd.f32 %v856, 1e-05
            %v889 = vadd.f32 %v857, 1e-05
            %v890 = vadd.f32 %v858, 1e-05
            %v891 = vadd.f32 %v859, 1e-05
            %v892 = vadd.f32 %v860, 1e-05
            %v893 = vadd.f32 %v861, 1e-05
            %v894 = vadd.f32 %v862, 1e-05
            %v895 = vrsqrt.pop %v879
            %v896 = vmul.f32 %v895, %v879
            %v897 = vmul.f32 %v896, %v895
            %v898 = vmul.f32 0.5, %v897
            %v899 = vsub.f32 1.5, %v898
            %v900 = vmul.f32 %v895, %v899
            %vm901 = vweird.f32 %v879
            %vm902 = vweird.f32 %v895
            %vm903 = vmor %vm901, %vm902
            %v904 = vsel %vm903, %v895, %v900
            %v905 = vrsqrt.pop %v880
            %v906 = vmul.f32 %v905, %v880
            %v907 = vmul.f32 %v906, %v905
            %v908 = vmul.f32 0.5, %v907
            %v909 = vsub.f32 1.5, %v908
            %v910 = vmul.f32 %v905, %v909
            %vm911 = vweird.f32 %v880
            %vm912 = vweird.f32 %v905
            %vm913 = vmor %vm911, %vm912
            %v914 = vsel %vm913, %v905, %v910
            %v915 = vrsqrt.pop %v881
            %v916 = vmul.f32 %v915, %v881
            %v917 = vmul.f32 %v916, %v915
            %v918 = vmul.f32 0.5, %v917
            %v919 = vsub.f32 1.5, %v918
            %v920 = vmul.f32 %v915, %v919
            %vm921 = vweird.f32 %v881
            %vm922 = vweird.f32 %v915
            %vm923 = vmor %vm921, %vm922
            %v924 = vsel %vm923, %v915, %v920
            %v925 = vrsqrt.pop %v882
            %v926 = vmul.f32 %v925, %v882
            %v927 = vmul.f32 %v926, %v925
            %v928 = vmul.f32 0.5, %v927
            %v929 = vsub.f32 1.5, %v928
            %v930 = vmul.f32 %v925, %v929
            %vm931 = vweird.f32 %v882
            %vm932 = vweird.f32 %v925
            %vm933 = vmor %vm931, %vm932
            %v934 = vsel %vm933, %v925, %v930
            %v935 = vrsqrt.pop %v883
            %v936 = vmul.f32 %v935, %v883
            %v937 = vmul.f32 %v936, %v935
            %v938 = vmul.f32 0.5, %v937
            %v939 = vsub.f32 1.5, %v938
            %v940 = vmul.f32 %v935, %v939
            %vm941 = vweird.f32 %v883
            %vm942 = vweird.f32 %v935
            %vm943 = vmor %vm941, %vm942
            %v944 = vsel %vm943, %v935, %v940
            %v945 = vrsqrt.pop %v884
            %v946 = vmul.f32 %v945, %v884
            %v947 = vmul.f32 %v946, %v945
            %v948 = vmul.f32 0.5, %v947
            %v949 = vsub.f32 1.5, %v948
            %v950 = vmul.f32 %v945, %v949
            %vm951 = vweird.f32 %v884
            %vm952 = vweird.f32 %v945
            %vm953 = vmor %vm951, %vm952
            %v954 = vsel %vm953, %v945, %v950
            %v955 = vrsqrt.pop %v885
            %v956 = vmul.f32 %v955, %v885
            %v957 = vmul.f32 %v956, %v955
            %v958 = vmul.f32 0.5, %v957
            %v959 = vsub.f32 1.5, %v958
            %v960 = vmul.f32 %v955, %v959
            %vm961 = vweird.f32 %v885
            %vm962 = vweird.f32 %v955
            %vm963 = vmor %vm961, %vm962
            %v964 = vsel %vm963, %v955, %v960
            %v965 = vrsqrt.pop %v886
            %v966 = vmul.f32 %v965, %v886
            %v967 = vmul.f32 %v966, %v965
            %v968 = vmul.f32 0.5, %v967
            %v969 = vsub.f32 1.5, %v968
            %v970 = vmul.f32 %v965, %v969
            %vm971 = vweird.f32 %v886
            %vm972 = vweird.f32 %v965
            %vm973 = vmor %vm971, %vm972
            %v974 = vsel %vm973, %v965, %v970
            %v975 = vrsqrt.pop %v887
            %v976 = vmul.f32 %v975, %v887
            %v977 = vmul.f32 %v976, %v975
            %v978 = vmul.f32 0.5, %v977
            %v979 = vsub.f32 1.5, %v978
            %v980 = vmul.f32 %v975, %v979
            %vm981 = vweird.f32 %v887
            %vm982 = vweird.f32 %v975
            %vm983 = vmor %vm981, %vm982
            %v984 = vsel %vm983, %v975, %v980
            %v985 = vrsqrt.pop %v888
            %v986 = vmul.f32 %v985, %v888
            %v987 = vmul.f32 %v986, %v985
            %v988 = vmul.f32 0.5, %v987
            %v989 = vsub.f32 1.5, %v988
            %v990 = vmul.f32 %v985, %v989
            %vm991 = vweird.f32 %v888
            %vm992 = vweird.f32 %v985
            %vm993 = vmor %vm991, %vm992
            %v994 = vsel %vm993, %v985, %v990
            %v995 = vrsqrt.pop %v889
            %v996 = vmul.f32 %v995, %v889
            %v997 = vmul.f32 %v996, %v995
            %v998 = vmul.f32 0.5, %v997
            %v999 = vsub.f32 1.5, %v998
            %v1000 = vmul.f32 %v995, %v999
            %vm1001 = vweird.f32 %v889
            %vm1002 = vweird.f32 %v995
            %vm1003 = vmor %vm1001, %vm1002
            %v1004 = vsel %vm1003, %v995, %v1000
            %v1005 = vrsqrt.pop %v890
            %v1006 = vmul.f32 %v1005, %v890
            %v1007 = vmul.f32 %v1006, %v1005
            %v1008 = vmul.f32 0.5, %v1007
            %v1009 = vsub.f32 1.5, %v1008
            %v1010 = vmul.f32 %v1005, %v1009
            %vm1011 = vweird.f32 %v890
            %vm1012 = vweird.f32 %v1005
            %vm1013 = vmor %vm1011, %vm1012
            %v1014 = vsel %vm1013, %v1005, %v1010
            %v1015 = vrsqrt.pop %v891
            %v1016 = vmul.f32 %v1015, %v891
            %v1017 = vmul.f32 %v1016, %v1015
            %v1018 = vmul.f32 0.5, %v1017
            %v1019 = vsub.f32 1.5, %v1018
            %v1020 = vmul.f32 %v1015, %v1019
            %vm1021 = vweird.f32 %v891
            %vm1022 = vweird.f32 %v1015
            %vm1023 = vmor %vm1021, %vm1022
            %v1024 = vsel %vm1023, %v1015, %v1020
            %v1025 = vrsqrt.pop %v892
            %v1026 = vmul.f32 %v1025, %v892
            %v1027 = vmul.f32 %v1026, %v1025
            %v1028 = vmul.f32 0.5, %v1027
            %v1029 = vsub.f32 1.5, %v1028
            %v1030 = vmul.f32 %v1025, %v1029
            %vm1031 = vweird.f32 %v892
            %vm1032 = vweird.f32 %v1025
            %vm1033 = vmor %vm1031, %vm1032
            %v1034 = vsel %vm1033, %v1025, %v1030
            %v1035 = vrsqrt.pop %v893
            %v1036 = vmul.f32 %v1035, %v893
            %v1037 = vmul.f32 %v1036, %v1035
            %v1038 = vmul.f32 0.5, %v1037
            %v1039 = vsub.f32 1.5, %v1038
            %v1040 = vmul.f32 %v1035, %v1039
            %vm1041 = vweird.f32 %v893
            %vm1042 = vweird.f32 %v1035
            %vm1043 = vmor %vm1041, %vm1042
            %v1044 = vsel %vm1043, %v1035, %v1040
            %v1045 = vrsqrt.pop %v894
            %v1046 = vmul.f32 %v1045, %v894
            %v1047 = vmul.f32 %v1046, %v1045
            %v1048 = vmul.f32 0.5, %v1047
            %v1049 = vsub.f32 1.5, %v1048
            %v1050 = vmul.f32 %v1045, %v1049
            %vm1051 = vweird.f32 %v894
            %vm1052 = vweird.f32 %v1045
            %vm1053 = vmor %vm1051, %vm1052
            %v1054 = vsel %vm1053, %v1045, %v1050
            %v1055 = vmul.f32 %v863, %v904
            %v1056 = vmul.f32 %v864, %v914
            %v1057 = vmul.f32 %v865, %v924
            %v1058 = vmul.f32 %v866, %v934
            %v1059 = vmul.f32 %v867, %v944
            %v1060 = vmul.f32 %v868, %v954
            %v1061 = vmul.f32 %v869, %v964
            %v1062 = vmul.f32 %v870, %v974
            %v1063 = vmul.f32 %v871, %v984
            %v1064 = vmul.f32 %v872, %v994
            %v1065 = vmul.f32 %v873, %v1004
            %v1066 = vmul.f32 %v874, %v1014
            %v1067 = vmul.f32 %v875, %v1024
            %v1068 = vmul.f32 %v876, %v1034
            %v1069 = vmul.f32 %v877, %v1044
            %v1070 = vmul.f32 %v878, %v1054
            %vm1071 = vcmask 7168
            %1072 = vst.msk [vmem:[#allocation5] sm:$0xff] %vm1071, %v1055
            %1073 = vst.msk [vmem:[#allocation5 + $0x8] sm:$0xff] %vm1071, %v1056
            %1074 = vst.msk [vmem:[#allocation5 + $0x10] sm:$0xff] %vm1071, %v1057
            %1075 = vst.msk [vmem:[#allocation5 + $0x18] sm:$0xff] %vm1071, %v1058
            %1076 = vst.msk [vmem:[#allocation5 + $0x20] sm:$0xff] %vm1071, %v1059
            %1077 = vst.msk [vmem:[#allocation5 + $0x28] sm:$0xff] %vm1071, %v1060
            %1078 = vst.msk [vmem:[#allocation5 + $0x30] sm:$0xff] %vm1071, %v1061
            %1079 = vst.msk [vmem:[#allocation5 + $0x38] sm:$0xff] %vm1071, %v1062
            %1080 = vst.msk [vmem:[#allocation5 + $0x40] sm:$0xff] %vm1071, %v1063
            %1081 = vst.msk [vmem:[#allocation5 + $0x48] sm:$0xff] %vm1071, %v1064
            %1082 = vst.msk [vmem:[#allocation5 + $0x50] sm:$0xff] %vm1071, %v1065
            %1083 = vst.msk [vmem:[#allocation5 + $0x58] sm:$0xff] %vm1071, %v1066
            %1084 = vst.msk [vmem:[#allocation5 + $0x60] sm:$0xff] %vm1071, %v1067
            %1085 = vst.msk [vmem:[#allocation5 + $0x68] sm:$0xff] %vm1071, %v1068
            %1086 = vst.msk [vmem:[#allocation5 + $0x70] sm:$0xff] %vm1071, %v1069
            %1087 = vst.msk [vmem:[#allocation5 + $0x78] sm:$0xff] %vm1071, %v1070
            %v1088 = vld [vmem:[%s3] sm:$0xff]
            %v1089 = vld [vmem:[%s3 + $0x8] sm:$0xff]
            %v1090 = vld [vmem:[%s3 + $0x10] sm:$0xff]
            %v1091 = vld [vmem:[%s3 + $0x18] sm:$0xff]
            %v1092 = vld [vmem:[%s3 + $0x20] sm:$0xff]
            %v1093 = vld [vmem:[%s3 + $0x28] sm:$0xff]
            %v1094 = vld [vmem:[%s3 + $0x30] sm:$0xff]
            %v1095 = vld [vmem:[%s3 + $0x38] sm:$0xff]
            %v1096 = vld [vmem:[%s3 + $0x40] sm:$0xff]
            %v1097 = vld [vmem:[%s3 + $0x48] sm:$0xff]
            %v1098 = vld [vmem:[%s3 + $0x50] sm:$0xff]
            %v1099 = vld [vmem:[%s3 + $0x58] sm:$0xff]
            %v1100 = vld [vmem:[%s3 + $0x60] sm:$0xff]
            %v1101 = vld [vmem:[%s3 + $0x68] sm:$0xff]
            %v1102 = vld [vmem:[%s3 + $0x70] sm:$0xff]
            %v1103 = vld [vmem:[%s3 + $0x78] sm:$0xff]
            %v1104 = vmul.f32 %v767, %v1055
            %v1105 = vmul.f32 %v768, %v1056
            %v1106 = vmul.f32 %v769, %v1057
            %v1107 = vmul.f32 %v770, %v1058
            %v1108 = vmul.f32 %v771, %v1059
            %v1109 = vmul.f32 %v772, %v1060
            %v1110 = vmul.f32 %v773, %v1061
            %v1111 = vmul.f32 %v774, %v1062
            %v1112 = vmul.f32 %v775, %v1063
            %v1113 = vmul.f32 %v776, %v1064
            %v1114 = vmul.f32 %v777, %v1065
            %v1115 = vmul.f32 %v778, %v1066
            %v1116 = vmul.f32 %v779, %v1067
            %v1117 = vmul.f32 %v780, %v1068
            %v1118 = vmul.f32 %v781, %v1069
            %v1119 = vmul.f32 %v782, %v1070
            %v1120 = vsub.f32 %v1088, %v1104
            %v1121 = vsub.f32 %v1089, %v1105
            %v1122 = vsub.f32 %v1090, %v1106
            %v1123 = vsub.f32 %v1091, %v1107
            %v1124 = vsub.f32 %v1092, %v1108
            %v1125 = vsub.f32 %v1093, %v1109
            %v1126 = vsub.f32 %v1094, %v1110
            %v1127 = vsub.f32 %v1095, %v1111
            %v1128 = vsub.f32 %v1096, %v1112
            %v1129 = vsub.f32 %v1097, %v1113
            %v1130 = vsub.f32 %v1098, %v1114
            %v1131 = vsub.f32 %v1099, %v1115
            %v1132 = vsub.f32 %v1100, %v1116
            %v1133 = vsub.f32 %v1101, %v1117
            %v1134 = vsub.f32 %v1102, %v1118
            %v1135 = vsub.f32 %v1103, %v1119
            %1136 = vst.msk [vmem:[#allocation6] sm:$0xff] %vm1071, %v1120
            %1137 = vst.msk [vmem:[#allocation6 + $0x8] sm:$0xff] %vm1071, %v1121
            %1138 = vst.msk [vmem:[#allocation6 + $0x10] sm:$0xff] %vm1071, %v1122
            %1139 = vst.msk [vmem:[#allocation6 + $0x18] sm:$0xff] %vm1071, %v1123
            %1140 = vst.msk [vmem:[#allocation6 + $0x20] sm:$0xff] %vm1071, %v1124
            %1141 = vst.msk [vmem:[#allocation6 + $0x28] sm:$0xff] %vm1071, %v1125
            %1142 = vst.msk [vmem:[#allocation6 + $0x30] sm:$0xff] %vm1071, %v1126
            %1143 = vst.msk [vmem:[#allocation6 + $0x38] sm:$0xff] %vm1071, %v1127
            %1144 = vst.msk [vmem:[#allocation6 + $0x40] sm:$0xff] %vm1071, %v1128
            %1145 = vst.msk [vmem:[#allocation6 + $0x48] sm:$0xff] %vm1071, %v1129
            %1146 = vst.msk [vmem:[#allocation6 + $0x50] sm:$0xff] %vm1071, %v1130
            %1147 = vst.msk [vmem:[#allocation6 + $0x58] sm:$0xff] %vm1071, %v1131
            %1148 = vst.msk [vmem:[#allocation6 + $0x60] sm:$0xff] %vm1071, %v1132
            %1149 = vst.msk [vmem:[#allocation6 + $0x68] sm:$0xff] %vm1071, %v1133
            %1150 = vst.msk [vmem:[#allocation6 + $0x70] sm:$0xff] %vm1071, %v1134
            %1151 = vst.msk [vmem:[#allocation6 + $0x78] sm:$0xff] %vm1071, %v1135
          $region52: #{tpu_custom_call.1} parent=47 // pred_fallthru
            _
          %s1152 = smul.u32 %s23, 32
          %s1153 = smul.addr %s1152, 4
          %s1154 = scalar_lea.vmem [#allocation2], %s1153
          %v1155 = vld [vmem:[%s1154] sm:$0xff]
          %v1156 = vunpack.c.l.bf16 %v1155
          %v1157 = vunpack.c.h.bf16 %v1155
          %v1158 = vld [vmem:[#allocation5] sm:$0xff]
          %1160 = vset.pattern.permute.xlu0 0
          %1161 = vperm.xlu0 %1160, %v1158
          %v1162 = vpop.permute.xlu0 %1161
          %v1164 = vmul.f32 %v1156, %v1162
          %v1165 = vmul.f32 %v1157, %v1162
          %v1166 = vld [vmem:[#allocation6] sm:$0xff]
          %1168 = vset.pattern.permute.xlu0 0
          %1169 = vperm.xlu0 %1168, %v1166
          %v1170 = vpop.permute.xlu0 %1169
          %v1172 = vadd.f32 %v1164, %v1170
          %v1173 = vadd.f32 %v1165, %v1170
          %v1174 = vmax.f32 %v1172, 0.0
          %v1175 = vmax.f32 %v1173, 0.0
          %1176 = vst [vmem:[%s214] sm:$0xff] %v1174
          %1177 = vst [vmem:[%s214 + $0x8] sm:$0xff] %v1175
        $region48: #{tpu_custom_call.1} parent=35 // pred_fallthru
          _
        %s1178 = sand.u32 %s133, 1
        %s1179 = scalar_lea.sflag [#allocation8], %s1178
        %s1180 = sand.u32 %s133, 1
        %s1181 = smul.addr %s1180, 16
        %s1182 = scalar_lea.vmem [#allocation7], %s1181
        // Predicated region
        $region53: #{tpu_custom_call.1} parent=35 // pred_check
          %p1183 = pneg %p143
        $region54: #{tpu_custom_call.1} parent=35 // pred_check_branch
          %1185 = sbr.rel (%p1183) target = $region56
        $region55: #{tpu_custom_call.1} parent=35 // pred_region
          %s1186 = smul.u32 %s23, %s22
          %1188 = vsyncadd %s1179, 0
          %s1189 = smul.addr %s1186, 2
          %s1190 = smul.addr %s1189, 8
          %s1191 = scalar_lea.hbm %s4, %s1190
          %s1193 = sshll.u32 %s1182, 4
          %s1194 = int_to_ptr.vmem [resolvable:$true] %s1193
          %s1195 = sshll.u32 %s1191, 4
          %s1196 = int_to_ptr.hbm [resolvable:$true] %s1195
          %1198 = dma.vmem_to_hbm [thread:$0]  %s1194, 256, %s1196, %s1179
        $region56: #{tpu_custom_call.1} parent=35 // pred_fallthru
          _
      $region36: #{tpu_custom_call.1} parent=5 // pred_fallthru
        _
      %p1199 = scmp.le.s32.totalorder 2, %s13
      // Predicated region
      $region57: #{tpu_custom_call.1} parent=5 // pred_check
        %p1200 = pneg %p1199
      $region58: #{tpu_custom_call.1} parent=5 // pred_check_branch
        %1202 = sbr.rel (%p1200) target = $region60
      $region59: #{tpu_custom_call.1} parent=5 // pred_region
        %s1203 = ssub.s32 %s13, 2
        // Predicated region
        $region61: #{tpu_custom_call.1} parent=59 // pred_check
          %p1204 = pneg %p149
        $region62: #{tpu_custom_call.1} parent=59 // pred_check_branch
          %1206 = sbr.rel (%p1204) target = $region64
        $region63: #{tpu_custom_call.1} parent=59 // pred_region
          %s1207 = sand.u32 %s134, 1
          %s1208 = scalar_lea.sflag [#allocation8], %s1207
          %s1209 = sand.u32 %s134, 1
          %s1210 = smul.addr %s1209, 16
          %s1211 = scalar_lea.vmem [#allocation7], %s1210
          %1213 = dma.done %s1208, 256
        $region64: #{tpu_custom_call.1} parent=59 // pred_fallthru
          _
      $region60: #{tpu_custom_call.1} parent=5 // pred_fallthru
        _
    $region6: #{tpu_custom_call.1} parent=1 // loop_footer
      %s17 = sadd.s32 1, %s13
    $region7: #{tpu_custom_call.1} parent=1 // loop_footer_branch
      %12 = sbr.rel target = $region3
    $region8: #{tpu_custom_call.1} parent=1 // loop_exit
      _
    %1214 = vsyncpa [#allocation8], 1
    %s1215 = scalar_lea.sflag [#allocation8], 1
    %1216 = vsyncpa %s1215, 1

</llo_original>
